<compile_context>
chip_gen: v7x
topology: tpu7x:2x2x1
jax: 0.10.0
libtpu: 0.0.40
codegen_flags: <defaults>
</compile_context>

<pallas_src>
import functools

import jax
import jax.numpy as jnp
from jax import lax
from jax.experimental import pallas as pl
from jax.experimental.pallas import tpu as pltpu


# ----------------------------------------------------------------------------
# JAX glue: same-padding, unfold (patch extraction), fold, conv2d, ELU
# ----------------------------------------------------------------------------
def _same_padding_amounts(H, W, k, stride):
    out_r = (H + stride - 1) // stride
    out_c = (W + stride - 1) // stride
    pad_r = max(0, (out_r - 1) * stride + k - H)
    pad_c = max(0, (out_c - 1) * stride + k - W)
    top, left = pad_r // 2, pad_c // 2
    return left, pad_c - left, top, pad_r - top      # (left, right, top, bottom)


def _pad_same(x, k, stride):
    H, W = x.shape[2], x.shape[3]
    l, r, t, b = _same_padding_amounts(H, W, k, stride)
    return jnp.pad(x, ((0, 0), (0, 0), (t, b), (l, r)))


def extract_patches(x, k, stride, padding='same'):
    """x: [B, C, H, W] -> [B, L, C*k*k] in nn.Unfold's (c, kh, kw) feature order."""
    B, C = x.shape[0], x.shape[1]
    xp = _pad_same(x, k, stride) if padding == 'same' else x
    Hp, Wp = xp.shape[2], xp.shape[3]
    nH = (Hp - k) // stride + 1
    nW = (Wp - k) // stride + 1
    slices = []
    for ki in range(k):
        for kj in range(k):
            s = lax.slice(xp, (0, 0, ki, kj),
                          (B, C, ki + (nH - 1) * stride + 1,
                           kj + (nW - 1) * stride + 1),
                          (1, 1, stride, stride))          # [B, C, nH, nW]
            slices.append(s)
    p = jnp.stack(slices, axis=2)                          # [B, C, k*k, nH, nW]
    p = p.reshape(B, C * k * k, nH * nW)                   # (c, kh, kw) order
    return p.transpose(0, 2, 1)                            # [B, L, C*k*k]


def fold2d(cols, C, k, H, W, stride, pad):
    """cols: [C*k*k, L] -> [C, H, W], matching F.fold semantics."""
    nH = (H + 2 * pad - k) // stride + 1
    nW = (W + 2 * pad - k) // stride + 1
    cols = cols.reshape(C, k, k, nH, nW)
    out = jnp.zeros((C, H + 2 * pad, W + 2 * pad), cols.dtype)
    for ki in range(k):
        for kj in range(k):
            out = out.at[:, ki:ki + (nH - 1) * stride + 1:stride,
                            kj:kj + (nW - 1) * stride + 1:stride].add(cols[:, ki, kj])
    return out[:, pad:pad + H, pad:pad + W]


def conv2d(x, w, b, stride=1, padding=0):
    out = lax.conv_general_dilated(
        x, w, window_strides=(stride, stride),
        padding=((padding, padding), (padding, padding)),
        dimension_numbers=('NCHW', 'OIHW', 'NCHW'))
    return out + b[None, :, None, None]


def _elu(x):
    return jnp.where(x > 0, x, jnp.exp(jnp.minimum(x, 0.0)) - 1.0)


def _project_normalize(x_img, lin_w, lin_b, k, stride):
    """ELU(fc(unfold(same_pad(x)))) + per-patch L2 normalize, expressed as a conv.

    lin_w: [C*k*k, inter] with rows in nn.Unfold's (c, kh, kw) order.
    Returns [B, inter, L] -- already transposed for the in-kernel score matmul.
    """
    B, C = x_img.shape[0], x_img.shape[1]
    inter = lin_w.shape[1]
    xp = _pad_same(x_img, k, stride)
    cw = lin_w.reshape(C, k, k, inter).transpose(3, 0, 1, 2)    # OIHW conv kernel
    f = conv2d(xp, cw, lin_b, stride=stride, padding=0)         # [B, inter, nH, nW]
    f = _elu(f)
    # F.normalize(p=2, eps=1e-12): x / max(||x||, 1e-12) == x * rsqrt(max(ssq, 1e-24))
    ssq = jnp.sum(f * f, axis=1, keepdims=True)
    f = f * lax.rsqrt(jnp.maximum(ssq, 1e-24))
    return f.reshape(B, inter, -1)


# ----------------------------------------------------------------------------
# Pallas kernel: fused threshold + masked online softmax + (attn @ pi)
# ----------------------------------------------------------------------------
def gfam_attention_kernel(w_ref, xt_ref, pi_ref, tvec_ref, out_ref,
                          m_sc, l_sc, acc_sc,
                          *, softmax_scale, l2_total, l2_tile):
    t = pl.program_id(1)
    n_t = pl.num_programs(1)

    @pl.when(t == 0)
    def _():
        m_sc[...] = jnp.full_like(m_sc, -jnp.inf)
        l_sc[...] = jnp.zeros_like(l_sc)
        acc_sc[...] = jnp.zeros_like(acc_sc)

    # score tile [L1, TL2] = [L1, inter] @ [inter, TL2], plain M,K x K,N layout.
    # f32 operands keep the hard relu / (m != 0) threshold faithful to the f32
    # reference; K = inter is tiny so the extra MXU passes are negligible.
    score = jnp.dot(w_ref[0], xt_ref[0], preferred_element_type=jnp.float32)
    m = jnp.maximum(score + tvec_ref[0], 0.0)      # relu(score - mean*thr + bias)
    mask_b = (m != 0.0).astype(jnp.float32)
    s = score * m * softmax_scale

    # Only emit the padded-tail mask when padding actually exists (static).
    if l2_total % l2_tile != 0:
        col = t * l2_tile + lax.broadcasted_iota(jnp.int32, (1, l2_tile), 1)
        s = jnp.where(col < l2_total, s, -1e30)

    # Online softmax.  Reference semantics: the denominator includes masked
    # (m == 0) entries as exp(0 - max); only the numerator is masked.
    m_new = jnp.maximum(m_sc[...], jnp.max(s, axis=1, keepdims=True))
    alpha = jnp.exp(m_sc[...] - m_new)
    e = jnp.exp(s - m_new)
    l_sc[...] = alpha * l_sc[...] + jnp.sum(e, axis=1, keepdims=True)
    p_num = (e * mask_b).astype(jnp.bfloat16)                 # bf16 MXU operand
    acc_sc[...] = alpha * acc_sc[...] + jnp.dot(
        p_num, pi_ref[0], preferred_element_type=jnp.float32)
    m_sc[...] = m_new

    @pl.when(t == n_t - 1)
    def _():
        # Exact divide (epilogue only) -- avoids the approx-reciprocal error.
        out_ref[0] = acc_sc[...] / l_sc[...]


def gfam_attention(w_norm, x_t, pi, tvec, softmax_scale, l2_tile=1024):
    """w_norm [B,L1,inter] f32, x_t [B,inter,L2] f32, pi [B,L2,F] bf16,
    tvec [B,L1,1] f32 (= bias - mean*thr)  ->  [B,L1,F] f32 attention output."""
    B, L1, inter = w_norm.shape
    L2 = x_t.shape[2]
    Fdim = pi.shape[2]

    w_norm = w_norm.astype(jnp.float32)
    x_t = x_t.astype(jnp.float32)
    tvec = tvec.astype(jnp.float32)
    pi = pi.astype(jnp.bfloat16)

    # Zero-pad inter to a sublane multiple; zero feature columns add nothing to
    # the score contraction, so results are unchanged.
    interp = max(8, ((inter + 7) // 8) * 8)
    if interp != inter:
        w_norm = jnp.pad(w_norm, ((0, 0), (0, 0), (0, interp - inter)))
        x_t = jnp.pad(x_t, ((0, 0), (0, interp - inter), (0, 0)))

    # L2 tile is the lane dim of the x_t block -> multiple of 128.
    tl2 = min(int(l2_tile), ((L2 + 127) // 128) * 128)
    tl2 = max(128, (tl2 // 128) * 128)
    n_t = (L2 + tl2 - 1) // tl2
    L2p = n_t * tl2
    if L2p != L2:
        x_t = jnp.pad(x_t, ((0, 0), (0, 0), (0, L2p - L2)))
        pi = jnp.pad(pi, ((0, 0), (0, L2p - L2), (0, 0)))

    kernel = functools.partial(gfam_attention_kernel,
                               softmax_scale=float(softmax_scale),
                               l2_total=int(L2), l2_tile=int(tl2))

    # VMEM estimate: double-buffered inputs + resident output/accumulator.
    vmem_est = (2 * L1 * interp * 4 + 2 * interp * tl2 * 4 + 2 * tl2 * Fdim * 2
                + 2 * L1 * Fdim * 4 + L1 * Fdim * 4 + 8 * L1 * 4 + (2 << 20))
    vmem_limit = int(min(max(2 * vmem_est, 32 * 1024 * 1024), 96 * 1024 * 1024))

    return pl.pallas_call(
        kernel,
        out_shape=jax.ShapeDtypeStruct((B, L1, Fdim), jnp.float32),
        grid_spec=pltpu.PrefetchScalarGridSpec(
            num_scalar_prefetch=0,
            grid=(B, n_t),
            in_specs=[
                pl.BlockSpec((1, L1, interp), lambda b, t: (b, 0, 0)),   # queries (resident per b)
                pl.BlockSpec((1, interp, tl2), lambda b, t: (b, 0, t)),  # keys, pre-transposed
                pl.BlockSpec((1, tl2, Fdim), lambda b, t: (b, t, 0)),    # values (bf16 stream)
                pl.BlockSpec((1, L1, 1), lambda b, t: (b, 0, 0)),        # bias - mean*thr
            ],
            out_specs=pl.BlockSpec((1, L1, Fdim), lambda b, t: (b, 0, 0)),
            scratch_shapes=[
                pltpu.VMEM((L1, 1), jnp.float32),      # running row max
                pltpu.VMEM((L1, 1), jnp.float32),      # running softmax denominator
                pltpu.VMEM((L1, Fdim), jnp.float32),   # attn @ pi accumulator
            ],
        ),
        compiler_params=pltpu.CompilerParams(
            dimension_semantics=("parallel", "arbitrary"),
            vmem_limit_bytes=vmem_limit,
        ),
    )(w_norm, x_t, pi, tvec)


def gfam_attention_reference(w_norm, x_t, pi, thr, bias, softmax_scale):
    """Dense pure-JAX reference of the attention step (mirrors the torch code)."""
    score = jnp.einsum('bli,bij->blj', w_norm, x_t)               # [B, L1, L2]
    mean = jnp.mean(score, axis=2, keepdims=True)
    m = jnp.maximum(score - mean * thr[:, :, None] + bias[:, :, None], 0.0)
    mask_b = (m != 0.0).astype(jnp.float32)
    s = score * m * softmax_scale
    p = jax.nn.softmax(s, axis=2) * mask_b
    return jnp.einsum('blj,bjf->blf', p, pi)


# ----------------------------------------------------------------------------
# Parameter init (deterministic; shapes from GFAM.__init__)
# ----------------------------------------------------------------------------
def init_gfam_params(key, in_channels, inter_channels, ksize):
    Ffc = ksize * ksize * inter_channels
    keys = jax.random.split(key, 13)

    def init(k, shape, scale=0.05):
        return jax.random.normal(k, shape, jnp.float32) * scale

    return dict(
        g_w=init(keys[0], (inter_channels, in_channels, 3, 3)),
        g_b=init(keys[1], (inter_channels,)),
        theta_w=init(keys[2], (inter_channels, in_channels, 1, 1)),
        theta_b=init(keys[3], (inter_channels,)),
        fc1_w=init(keys[4], (Ffc, inter_channels)),
        fc1_b=init(keys[5], (inter_channels,)),
        fc2_w=init(keys[6], (Ffc, inter_channels)),
        fc2_b=init(keys[7], (inter_channels,)),
        thr_w=init(keys[8], (1, in_channels, ksize, ksize)),
        thr_b=init(keys[9], (1,)),
        bias_w=init(keys[10], (1, in_channels, ksize, ksize)),
        bias_b=init(keys[11], (1,)),
        # Graph_W is zero-initialized in __init__; use a small deterministic
        # nonzero init so the demo output is non-trivial.
        graph_w=init(keys[12], (in_channels * ksize * ksize,
                                in_channels * ksize * ksize), 0.02),
    )


# ----------------------------------------------------------------------------
# GFAM forward
# ----------------------------------------------------------------------------
def gfam_forward(params, b, *, ksize=4, stride_1=4, stride_2=1,
                 softmax_scale=10.0, l2_tile=1024, use_pallas=True):
    B, Cin, H, W = b.shape

    b1 = conv2d(b, params['g_w'], params['g_b'], stride=1, padding=1)     # g: 3x3, pad 1
    b2 = conv2d(b, params['theta_w'], params['theta_b'], stride=1, padding=0)  # theta: 1x1
    b3 = b1
    # NOTE: self.W (1x1 conv) exists in the module __init__ but is unused in forward().

    b4 = _pad_same(b, ksize, stride_1)
    soft_thr = conv2d(b4, params['thr_w'], params['thr_b'],
                      stride=stride_1, padding=0).reshape(B, -1)          # [B, L1]
    soft_bias = conv2d(b4, params['bias_w'], params['bias_b'],
                       stride=stride_1, padding=0).reshape(B, -1)         # [B, L1]

    # Query / key projections hoisted out of the kernel (conv == unfold+Linear).
    w_norm = _project_normalize(b1, params['fc1_w'], params['fc1_b'],
                                ksize, stride_1).transpose(0, 2, 1)       # [B, L1, inter]
    x_t = _project_normalize(b3, params['fc2_w'], params['fc2_b'],
                             ksize, stride_2)                             # [B, inter, L2]
    L2 = x_t.shape[2]

    # Value patches; bf16 halves the dominant HBM stream into the kernel.
    pi = extract_patches(b2.astype(jnp.bfloat16), ksize, stride_2, 'same')  # [B, L2, inter*k*k]

    if use_pallas:
        # Exact row mean of the full score map: mean_r = w_r . sum_j(x_j) / L2,
        # folded with thr/bias into a single per-row additive term.
        xsum = jnp.sum(x_t, axis=2)                                       # [B, inter]
        mean = jnp.einsum('bli,bi->bl', w_norm, xsum) / float(L2)         # [B, L1]
        tvec = (soft_bias - mean * soft_thr)[:, :, None]                  # [B, L1, 1]
        yi = gfam_attention(w_norm, x_t, pi, tvec, softmax_scale, l2_tile)
    else:
        yi = gfam_attention_reference(w_norm, x_t, pi.astype(jnp.float32),
                                      soft_thr, soft_bias, softmax_scale)

    # Graph_W matmul hoisted out of the kernel (plain XLA batched matmul).
    yi = jnp.einsum('blf,fg->blg', yi, params['graph_w'])                 # [B, L1, C*k*k]

    # Fold back with padding = paddings[0] from same_padding at stride_2.
    pad_fold = _same_padding_amounts(H, W, ksize, stride_2)[0]
    L1, Ffold = yi.shape[1], yi.shape[2]
    Cfold = Ffold // (ksize * ksize)

    # Overlap-count divisor (fold(unfold(ones))) -- data-independent, once.
    ones_cols = jnp.ones((Cfold * ksize * ksize, L1), jnp.float32)
    out_mask = fold2d(ones_cols, Cfold, ksize, H, W, stride_1, pad_fold)
    out_mask = out_mask + (out_mask == 0.0).astype(jnp.float32)

    z = jax.vmap(lambda cols: fold2d(cols.T, Cfold, ksize, H, W,
                                     stride_1, pad_fold))(yi)             # [B, C, H, W]
    return z / out_mask[None]


# ----------------------------------------------------------------------------
if __name__ == "__main__":
    key = jax.random.PRNGKey(0)
    # in_channels == inter_channels is required by the reference Graph_W matmul.
    B, Cin, H, W = 2, 8, 20, 20
    inter = 8
    ksize, stride_1, stride_2 = 4, 4, 1

    kp, kx = jax.random.split(key)
    params = init_gfam_params(kp, Cin, inter, ksize)
    x = jax.random.normal(kx, (B, Cin, H, W), jnp.float32)

    # l2_tile=128 with L2 = 20*20 = 400 -> 4 L2 tiles and 112 padded columns,
    # exercising both the multi-tile online softmax and the padded-tail mask.
    fwd = jax.jit(functools.partial(gfam_forward, ksize=ksize, stride_1=stride_1,
                                    stride_2=stride_2, softmax_scale=10.0,
                                    l2_tile=128, use_pallas=True))
    ref = jax.jit(functools.partial(gfam_forward, ksize=ksize, stride_1=stride_1,
                                    stride_2=stride_2, softmax_scale=10.0,
                                    use_pallas=False))

    out = jax.block_until_ready(fwd(params, x))
    out_ref = jax.block_until_ready(ref(params, x))

    assert out.shape == (B, Cin, H, W), out.shape
    assert bool(jnp.all(jnp.isfinite(out)))
    rel = float(jnp.linalg.norm(out - out_ref) /
                (jnp.linalg.norm(out_ref) + 1e-12))
    assert rel < 5e-2, f"Pallas vs reference relative error too large: {rel}"
    print("KERNEL_OK")
</pallas_src>

<mosaic_0001>
module attributes {stable_mosaic.version = 11 : i64} {
  func.func @gfam_attention_kernel(%arg0: i32, %arg1: i32, %arg2: memref<1x25x8xf32, #tpu.memory_space<vmem>>, %arg3: memref<1x8x128xf32, #tpu.memory_space<vmem>>, %arg4: memref<1x128x128xbf16, #tpu.memory_space<vmem>>, %arg5: memref<1x25x1xf32, #tpu.memory_space<vmem>>, %arg6: memref<1x25x128xf32, #tpu.memory_space<vmem>>, %arg7: memref<25x1xf32, #tpu.memory_space<vmem>>, %arg8: memref<25x1xf32, #tpu.memory_space<vmem>>, %arg9: memref<25x128xf32, #tpu.memory_space<vmem>>) attributes {dimension_semantics = [#tpu.dimension_semantics<parallel>, #tpu.dimension_semantics<arbitrary>], iteration_bounds = array<i64: 2, 4>, scalar_prefetch = 0 : i64, scratch_operands = 3 : i64, tpu.core_type = #tpu.core_type<tc>, window_params = [{transform_indices = @transform_0, window_bounds = array<i64: 1, 25, 8>}, {transform_indices = @transform_1, window_bounds = array<i64: 1, 8, 128>}, {transform_indices = @transform_2, window_bounds = array<i64: 1, 128, 128>}, {transform_indices = @transform_3, window_bounds = array<i64: 1, 25, 1>}, {transform_indices = @transform_4, window_bounds = array<i64: 1, 25, 128>}]} {
    %c0_i32 = arith.constant 0 : i32
    %0 = arith.cmpi eq, %arg1, %c0_i32 : i32
    %1 = arith.extui %0 : i1 to i32
    %c0_i32_0 = arith.constant 0 : i32
    %2 = arith.cmpi ne, %1, %c0_i32_0 : i32
    scf.if %2 {
      %cst_34 = arith.constant 0xFF800000 : f32
      %61 = vector.broadcast %cst_34 : f32 to vector<25x1xf32>
      %c0_35 = arith.constant 0 : index
      %c0_36 = arith.constant 0 : index
      %62 = vector.load %arg7[%c0_35, %c0_36] : memref<25x1xf32, #tpu.memory_space<vmem>>, vector<25x1xf32>
      tpu.vector_store %arg7[%c0_35, %c0_36], %61 {strides = array<i32>} : memref<25x1xf32, #tpu.memory_space<vmem>>, vector<25x1xf32>,
      %cst_37 = arith.constant 0.000000e+00 : f32
      %63 = vector.broadcast %cst_37 : f32 to vector<25x1xf32>
      %c0_38 = arith.constant 0 : index
      %c0_39 = arith.constant 0 : index
      %64 = vector.load %arg8[%c0_38, %c0_39] : memref<25x1xf32, #tpu.memory_space<vmem>>, vector<25x1xf32>
      tpu.vector_store %arg8[%c0_38, %c0_39], %63 {strides = array<i32>} : memref<25x1xf32, #tpu.memory_space<vmem>>, vector<25x1xf32>,
      %cst_40 = arith.constant 0.000000e+00 : f32
      %65 = vector.broadcast %cst_40 : f32 to vector<25x128xf32>
      %c0_41 = arith.constant 0 : index
      %c0_42 = arith.constant 0 : index
      %66 = vector.load %arg9[%c0_41, %c0_42] : memref<25x128xf32, #tpu.memory_space<vmem>>, vector<25x128xf32>
      tpu.vector_store %arg9[%c0_41, %c0_42], %65 {strides = array<i32>} : memref<25x128xf32, #tpu.memory_space<vmem>>, vector<25x128xf32>,
    } else {
    }
    %c0 = arith.constant 0 : index
    %c0_1 = arith.constant 0 : index
    %c0_2 = arith.constant 0 : index
    %3 = vector.load %arg2[%c0, %c0_1, %c0_2] : memref<1x25x8xf32, #tpu.memory_space<vmem>>, vector<1x25x8xf32>
    %4 = vector.shape_cast %3 : vector<1x25x8xf32> to vector<25x8xf32>
    %c0_3 = arith.constant 0 : index
    %c0_4 = arith.constant 0 : index
    %c0_5 = arith.constant 0 : index
    %5 = vector.load %arg3[%c0_3, %c0_4, %c0_5] : memref<1x8x128xf32, #tpu.memory_space<vmem>>, vector<1x8x128xf32>
    %6 = vector.shape_cast %5 : vector<1x8x128xf32> to vector<8x128xf32>
    %cst = arith.constant dense<0.000000e+00> : vector<25x128xf32>
    %7 = tpu.matmul %4, %6, %cst {dimension_numbers = #tpu.dot_dimension_numbers<[1], [0], [0], [1], [0, 0, 1, 1], [], []>} : vector<25x8xf32>, vector<8x128xf32>, vector<25x128xf32> -> vector<25x128xf32>
    %c0_6 = arith.constant 0 : index
    %c0_7 = arith.constant 0 : index
    %c0_8 = arith.constant 0 : index
    %8 = vector.load %arg5[%c0_6, %c0_7, %c0_8] : memref<1x25x1xf32, #tpu.memory_space<vmem>>, vector<1x25x1xf32>
    %9 = vector.shape_cast %8 : vector<1x25x1xf32> to vector<25x1xf32>
    %10 = vector.broadcast %9 : vector<25x1xf32> to vector<25x128xf32>
    %11 = arith.addf %7, %10 : vector<25x128xf32>
    %cst_9 = arith.constant 0.000000e+00 : f32
    %12 = vector.broadcast %cst_9 : f32 to vector<25x128xf32>
    %13 = arith.maximumf %11, %12 : vector<25x128xf32>
    %cst_10 = arith.constant 0.000000e+00 : f32
    %14 = vector.broadcast %cst_10 : f32 to vector<25x128xf32>
    %15 = arith.cmpf one, %13, %14 : vector<25x128xf32>
    %16 = arith.extui %15 : vector<25x128xi1> to vector<25x128xi32>
    %17 = arith.sitofp %16 : vector<25x128xi32> to vector<25x128xf32>
    %18 = arith.mulf %7, %13 : vector<25x128xf32>
    %cst_11 = arith.constant 1.000000e+01 : f32
    %19 = vector.broadcast %cst_11 : f32 to vector<25x128xf32>
    %20 = arith.mulf %18, %19 : vector<25x128xf32>
    %c128_i32 = arith.constant 128 : i32
    %21 = arith.muli %arg1, %c128_i32 : i32
    %22 = tpu.iota {dimensions = array<i32: 1>} : vector<1x128xi32>
    %23 = vector.broadcast %21 : i32 to vector<1x128xi32>
    %24 = arith.addi %23, %22 : vector<1x128xi32>
    %c400_i32 = arith.constant 400 : i32
    %25 = vector.broadcast %c400_i32 : i32 to vector<1x128xi32>
    %26 = arith.cmpi slt, %24, %25 : vector<1x128xi32>
    %cst_12 = arith.constant -1.000000e+30 : f32
    %27 = vector.shape_cast %26 : vector<1x128xi1> to vector<1x128xi1>
    %28 = vector.broadcast %27 : vector<1x128xi1> to vector<25x128xi1>
    %29 = vector.broadcast %cst_12 : f32 to vector<25x128xf32>
    %30 = arith.select %28, %20, %29 : vector<25x128xi1>, vector<25x128xf32>
    %c0_13 = arith.constant 0 : index
    %c0_14 = arith.constant 0 : index
    %31 = vector.load %arg7[%c0_13, %c0_14] : memref<25x1xf32, #tpu.memory_space<vmem>>, vector<25x1xf32>
    %cst_15 = arith.constant dense<0xFF800000> : vector<25xf32>
    %32 = vector.multi_reduction <maximumf>, %30, %cst_15 [1] : vector<25x128xf32> to vector<25xf32>
    %33 = vector.shape_cast %32 : vector<25xf32> to vector<25x1xf32>
    %34 = arith.maximumf %31, %33 : vector<25x1xf32>
    %c0_16 = arith.constant 0 : index
    %c0_17 = arith.constant 0 : index
    %35 = vector.load %arg7[%c0_16, %c0_17] : memref<25x1xf32, #tpu.memory_space<vmem>>, vector<25x1xf32>
    %36 = arith.subf %35, %34 : vector<25x1xf32>
    %37 = math.exp %36 : vector<25x1xf32>
    %38 = vector.broadcast %34 : vector<25x1xf32> to vector<25x128xf32>
    %39 = arith.subf %30, %38 : vector<25x128xf32>
    %40 = math.exp %39 : vector<25x128xf32>
    %c0_18 = arith.constant 0 : index
    %c0_19 = arith.constant 0 : index
    %41 = vector.load %arg8[%c0_18, %c0_19] : memref<25x1xf32, #tpu.memory_space<vmem>>, vector<25x1xf32>
    %42 = arith.mulf %37, %41 : vector<25x1xf32>
    %cst_20 = arith.constant dense<0.000000e+00> : vector<25xf32>
    %43 = vector.multi_reduction <add>, %40, %cst_20 [1] : vector<25x128xf32> to vector<25xf32>
    %44 = vector.shape_cast %43 : vector<25xf32> to vector<25x1xf32>
    %45 = arith.addf %42, %44 : vector<25x1xf32>
    %c0_21 = arith.constant 0 : index
    %c0_22 = arith.constant 0 : index
    %46 = vector.load %arg8[%c0_21, %c0_22] : memref<25x1xf32, #tpu.memory_space<vmem>>, vector<25x1xf32>
    tpu.vector_store %arg8[%c0_21, %c0_22], %45 {strides = array<i32>} : memref<25x1xf32, #tpu.memory_space<vmem>>, vector<25x1xf32>,
    %47 = arith.mulf %40, %17 : vector<25x128xf32>
    %48 = arith.truncf %47 : vector<25x128xf32> to vector<25x128xbf16>
    %c0_23 = arith.constant 0 : index
    %c0_24 = arith.constant 0 : index
    %49 = vector.load %arg9[%c0_23, %c0_24] : memref<25x128xf32, #tpu.memory_space<vmem>>, vector<25x128xf32>
    %50 = vector.broadcast %37 : vector<25x1xf32> to vector<25x128xf32>
    %51 = arith.mulf %50, %49 : vector<25x128xf32>
    %c0_25 = arith.constant 0 : index
    %c0_26 = arith.constant 0 : index
    %c0_27 = arith.constant 0 : index
    %52 = vector.load %arg4[%c0_25, %c0_26, %c0_27] : memref<1x128x128xbf16, #tpu.memory_space<vmem>>, vector<1x128x128xbf16>
    %53 = vector.shape_cast %52 : vector<1x128x128xbf16> to vector<128x128xbf16>
    %cst_28 = arith.constant dense<0.000000e+00> : vector<25x128xf32>
    %54 = tpu.matmul %48, %53, %cst_28 {dimension_numbers = #tpu.dot_dimension_numbers<[1], [0], [0], [1], [0, 0, 1, 1], [], []>} : vector<25x128xbf16>, vector<128x128xbf16>, vector<25x128xf32> -> vector<25x128xf32>
    %55 = arith.addf %51, %54 : vector<25x128xf32>
    %c0_29 = arith.constant 0 : index
    %c0_30 = arith.constant 0 : index
    %56 = vector.load %arg9[%c0_29, %c0_30] : memref<25x128xf32, #tpu.memory_space<vmem>>, vector<25x128xf32>
    tpu.vector_store %arg9[%c0_29, %c0_30], %55 {strides = array<i32>} : memref<25x128xf32, #tpu.memory_space<vmem>>, vector<25x128xf32>,
    %c0_31 = arith.constant 0 : index
    %c0_32 = arith.constant 0 : index
    %57 = vector.load %arg7[%c0_31, %c0_32] : memref<25x1xf32, #tpu.memory_space<vmem>>, vector<25x1xf32>
    tpu.vector_store %arg7[%c0_31, %c0_32], %34 {strides = array<i32>} : memref<25x1xf32, #tpu.memory_space<vmem>>, vector<25x1xf32>,
    %c3_i32 = arith.constant 3 : i32
    %58 = arith.cmpi eq, %arg1, %c3_i32 : i32
    %59 = arith.extui %58 : i1 to i32
    %c0_i32_33 = arith.constant 0 : i32
    %60 = arith.cmpi ne, %59, %c0_i32_33 : i32
    scf.if %60 {
      %c0_34 = arith.constant 0 : index
      %c0_35 = arith.constant 0 : index
      %61 = vector.load %arg9[%c0_34, %c0_35] : memref<25x128xf32, #tpu.memory_space<vmem>>, vector<25x128xf32>
      %c0_36 = arith.constant 0 : index
      %c0_37 = arith.constant 0 : index
      %62 = vector.load %arg8[%c0_36, %c0_37] : memref<25x1xf32, #tpu.memory_space<vmem>>, vector<25x1xf32>
      %63 = vector.broadcast %62 : vector<25x1xf32> to vector<25x128xf32>
      %64 = arith.divf %61, %63 : vector<25x128xf32>
      %c0_38 = arith.constant 0 : index
      %c0_39 = arith.constant 0 : index
      %c0_40 = arith.constant 0 : index
      %65 = vector.load %arg6[%c0_38, %c0_39, %c0_40] : memref<1x25x128xf32, #tpu.memory_space<vmem>>, vector<1x25x128xf32>
      %66 = vector.shape_cast %65 : vector<1x25x128xf32> to vector<25x128xf32>
      %67 = vector.shape_cast %64 : vector<25x128xf32> to vector<1x25x128xf32>
      tpu.vector_store %arg6[%c0_38, %c0_39, %c0_40], %67 {strides = array<i32>} : memref<1x25x128xf32, #tpu.memory_space<vmem>>, vector<1x25x128xf32>,
    } else {
    }
    return
  }
  func.func @transform_0(%arg0: i32, %arg1: i32) -> (i32, i32, i32) {
    %c0_i32 = arith.constant 0 : i32
    %c0_i32_0 = arith.constant 0 : i32
    %c0_i32_1 = arith.constant 0 : i32
    return %arg0, %c0_i32, %c0_i32_0 : i32, i32, i32
  }
  func.func @transform_1(%arg0: i32, %arg1: i32) -> (i32, i32, i32) {
    %c0_i32 = arith.constant 0 : i32
    %c0_i32_0 = arith.constant 0 : i32
    return %arg0, %c0_i32, %arg1 : i32, i32, i32
  }
  func.func @transform_2(%arg0: i32, %arg1: i32) -> (i32, i32, i32) {
    %c0_i32 = arith.constant 0 : i32
    %c0_i32_0 = arith.constant 0 : i32
    return %arg0, %arg1, %c0_i32 : i32, i32, i32
  }
  func.func @transform_3(%arg0: i32, %arg1: i32) -> (i32, i32, i32) {
    %c0_i32 = arith.constant 0 : i32
    %c0_i32_0 = arith.constant 0 : i32
    %c0_i32_1 = arith.constant 0 : i32
    return %arg0, %c0_i32, %c0_i32_0 : i32, i32, i32
  }
  func.func @transform_4(%arg0: i32, %arg1: i32) -> (i32, i32, i32) {
    %c0_i32 = arith.constant 0 : i32
    %c0_i32_0 = arith.constant 0 : i32
    %c0_i32_1 = arith.constant 0 : i32
    return %arg0, %c0_i32, %c0_i32_0 : i32, i32, i32
  }
}

</mosaic_0001>

<llo_original>
// kernel: sub.11
$region0: #{sub.11}
  #allocation0 [shape = 's32[1]{0}', space=sflag, size = 0x4, scoped, tag = 'scoped memory for sub.11']
  %s0 = inlined_call_operand.vmem [shape: f32[2,25,1], index: 0, kind: input, shape index: {}]
  %s1 = inlined_call_operand.vmem [shape: f32[2,25,1], index: 1, kind: input, shape index: {}]
  %s2 = inlined_call_operand.vmem [shape: f32[2,25,1], index: 2, kind: output, shape index: {}]
  %v3 = vld [vmem:[%s0] sm:$0xff]
  %v4 = vld [vmem:[%s1] sm:$0xff]
  %5 = xla_tuple %v3, %v4
  %6 = xla_tuple %5
  %v7 = vsub.f32 %v3, %v4
  %8 = xla_tuple %v7
  %9 = vst [vmem:[%s2] sm:$0xff] %v7
  %s10 = scalar_lea.vmem %s0, 32
  %v11 = vld [vmem:[%s10] sm:$0xff]
  %s12 = scalar_lea.vmem %s1, 32
  %v13 = vld [vmem:[%s12] sm:$0xff]
  %14 = xla_tuple %v11, %v13
  %15 = xla_tuple %14
  %v16 = vsub.f32 %v11, %v13
  %17 = xla_tuple %v16
  %s18 = scalar_lea.vmem %s2, 32
  %19 = vst [vmem:[%s18] sm:$0xff] %v16
  %s20 = scalar_lea.vmem %s0, 8
  %v21 = vld [vmem:[%s20] sm:$0xff]
  %s22 = scalar_lea.vmem %s1, 8
  %v23 = vld [vmem:[%s22] sm:$0xff]
  %24 = xla_tuple %v21, %v23
  %25 = xla_tuple %24
  %v26 = vsub.f32 %v21, %v23
  %27 = xla_tuple %v26
  %s28 = scalar_lea.vmem %s2, 8
  %29 = vst [vmem:[%s28] sm:$0xff] %v26
  %s30 = scalar_lea.vmem %s0, 40
  %v31 = vld [vmem:[%s30] sm:$0xff]
  %s32 = scalar_lea.vmem %s1, 40
  %v33 = vld [vmem:[%s32] sm:$0xff]
  %34 = xla_tuple %v31, %v33
  %35 = xla_tuple %34
  %v36 = vsub.f32 %v31, %v33
  %37 = xla_tuple %v36
  %s38 = scalar_lea.vmem %s2, 40
  %39 = vst [vmem:[%s38] sm:$0xff] %v36
  %s40 = scalar_lea.vmem %s0, 16
  %v41 = vld [vmem:[%s40] sm:$0xff]
  %s42 = scalar_lea.vmem %s1, 16
  %v43 = vld [vmem:[%s42] sm:$0xff]
  %44 = xla_tuple %v41, %v43
  %45 = xla_tuple %44
  %v46 = vsub.f32 %v41, %v43
  %47 = xla_tuple %v46
  %s48 = scalar_lea.vmem %s2, 16
  %49 = vst [vmem:[%s48] sm:$0xff] %v46
  %s50 = scalar_lea.vmem %s0, 48
  %v51 = vld [vmem:[%s50] sm:$0xff]
  %s52 = scalar_lea.vmem %s1, 48
  %v53 = vld [vmem:[%s52] sm:$0xff]
  %54 = xla_tuple %v51, %v53
  %55 = xla_tuple %54
  %v56 = vsub.f32 %v51, %v53
  %57 = xla_tuple %v56
  %s58 = scalar_lea.vmem %s2, 48
  %59 = vst [vmem:[%s58] sm:$0xff] %v56
  %s60 = scalar_lea.vmem %s0, 24
  %v61 = vld [vmem:[%s60] sm:$0xff]
  %s62 = scalar_lea.vmem %s1, 24
  %v63 = vld [vmem:[%s62] sm:$0xff]
  %64 = xla_tuple %v61, %v63
  %65 = xla_tuple %64
  %v66 = vsub.f32 %v61, %v63
  %67 = xla_tuple %v66
  %s68 = scalar_lea.vmem %s2, 24
  %69 = vst [vmem:[%s68] sm:$0xff] %v66
  %s70 = scalar_lea.vmem %s0, 56
  %v71 = vld [vmem:[%s70] sm:$0xff]
  %s72 = scalar_lea.vmem %s1, 56
  %v73 = vld [vmem:[%s72] sm:$0xff]
  %74 = xla_tuple %v71, %v73
  %75 = xla_tuple %74
  %v76 = vsub.f32 %v71, %v73
  %77 = xla_tuple %v76
  %s78 = scalar_lea.vmem %s2, 56
  %79 = vst [vmem:[%s78] sm:$0xff] %v76

// kernel: gfam_forward.1
$region0: #{gfam_forward.1}
  #allocation0 [shape = 'u32[]', space=smem, size = 0x4, offset = 0x4, fixed_abs, tag = 'smem constant byte address 0x4 - core index']
  #allocation1 [shape = 'u32[144,128]{1,0:T(1,128)}', space=vmem, size = 0x12000, scoped, tag = 'internal scratch']
  #allocation2 [shape = 'f32[25,1]{1,0:T(8,128)}', space=vmem, size = 0x4000, scoped, tag = 'scratch operand']
  #allocation3 [shape = 'f32[25,1]{1,0:T(8,128)}', space=vmem, size = 0x4000, scoped, tag = 'scratch operand']
  #allocation4 [shape = 'f32[25,128]{1,0:T(8,128)}', space=vmem, size = 0x4000, scoped, tag = 'scratch operand']
  %s0 = inlined_call_operand.vmem [shape: f32[2,25,8], index: 0, kind: input, shape index: {}]
  %s1 = inlined_call_operand.vmem [shape: f32[2,8,512], index: 1, kind: input, shape index: {}]
  %s2 = inlined_call_operand.vmem [shape: bf16[2,512,128], index: 2, kind: input, shape index: {}]
  %s3 = inlined_call_operand.vmem [shape: f32[2,25,1], index: 3, kind: input, shape index: {}]
  %s4 = inlined_call_operand.vmem [shape: f32[2,25,128], index: 4, kind: output, shape index: {}]
  %s5 = sld [smem:[#allocation0]]
  $region57: #{gfam_forward.1} parent=0
    _
  %s7 = ssub.s32 1, %s5
  %s8 = scalar_select 0, %s7, %s5
  loop: start=0, step=1, limit=10
  $region2: #{gfam_forward.1} parent=0 // loop_pre_header
    _
  $region3: #{gfam_forward.1} parent=0 // loop_header
    %s10 = sphi 0, %s14
    %p11 = scmp.ge.s32.totalorder %s10, 10
    %s17 = sphi 0, %s29
    %s18 = sphi 0, %s25
    %s19 = sphi 0, %s17
    %s20 = sphi 0, %s18
    %s21 = sphi 0, %s19
    %s22 = sphi 0, %s20
    %s32 = sphi 0, %s34
    %s35 = sphi 0, %s32
    %s36 = sphi 0, %s35
    %s52 = sphi 0, %s36
    %s60 = sphi 0, %s62
    %s63 = sphi 0, %s60
    %s64 = sphi 0, %s63
    %s80 = sphi 0, %s64
    %s88 = sphi 0, %s90
    %s91 = sphi 0, %s88
    %s92 = sphi 0, %s91
    %s108 = sphi 0, %s92
    %s114 = sphi 0, %s116
    %s117 = sphi 0, %s114
    %s118 = sphi 0, %s117
    %s134 = sphi 0, %s118
    %s140 = sphi 0, %s142
    %s143 = sphi 0, %s140
    %s144 = sphi 0, %s143
    %s160 = sphi 0, %s144
  $region4: #{gfam_forward.1} parent=0 // loop_header_branch
    %13 = sbr.rel (%p11) target = $region8
  $region5: #{gfam_forward.1} parent=0 // loop_body
    %s15 = ssub.s32 %s10, 1
    %s16 = ssub.s32 %s10, 2
    %s23 = sadd.s32 1, %s18
    %p24 = scmp.ge.s32.totalorder %s23, 4
    %s25 = scalar_select %p24, 0, %s23
    %s26 = sadd.s32 1, %s17
    %s27 = scalar_select %p24, %s26, %s17
    %p28 = scmp.ge.s32.totalorder %s27, 2
    %s29 = scalar_select %p28, 0, %s27
    %s30 = ssub.s32 %s17, %s29
    %p31 = scmp.eq.s32.totalorder %s30, 0
    %s33 = sadd.s32 %s32, 1
    %s34 = scalar_select %p31, %s32, %s33
    %p37 = pneg %p31
    %p38 = scmp.eq.s32.totalorder %s10, 7
    %p39 = por %p37, %p38
    %p40 = scmp.ne.s32.totalorder %s32, %s35
    %p41 = scmp.eq.s32.totalorder %s10, 0
    %p42 = por %p40, %p41
    %p43 = scmp.ne.s32.totalorder %s32, %s35
    %p44 = scmp.eq.s32.totalorder %s15, 7
    %p45 = por %p43, %p44
    %p46 = scmp.ne.s32.totalorder %s35, %s36
    %p47 = scmp.eq.s32.totalorder %s15, 0
    %p48 = por %p46, %p47
    %p49 = scmp.ne.s32.totalorder %s35, %s36
    %p50 = scmp.eq.s32.totalorder %s16, 7
    %p51 = por %p49, %p50
    %p53 = scmp.ne.s32.totalorder %s36, %s52
    %p54 = scmp.eq.s32.totalorder %s16, 0
    %p55 = por %p53, %p54
    %s56 = ssub.s32 %s17, %s29
    %s57 = ssub.s32 %s18, %s25
    %s58 = sor.u32 %s56, %s57
    %p59 = scmp.eq.s32.totalorder %s58, 0
    %s61 = sadd.s32 %s60, 1
    %s62 = scalar_select %p59, %s60, %s61
    %p65 = pneg %p59
    %p66 = scmp.eq.s32.totalorder %s10, 7
    %p67 = por %p65, %p66
    %p68 = scmp.ne.s32.totalorder %s60, %s63
    %p69 = scmp.eq.s32.totalorder %s10, 0
    %p70 = por %p68, %p69
    %p71 = scmp.ne.s32.totalorder %s60, %s63
    %p72 = scmp.eq.s32.totalorder %s15, 7
    %p73 = por %p71, %p72
    %p74 = scmp.ne.s32.totalorder %s63, %s64
    %p75 = scmp.eq.s32.totalorder %s15, 0
    %p76 = por %p74, %p75
    %p77 = scmp.ne.s32.totalorder %s63, %s64
    %p78 = scmp.eq.s32.totalorder %s16, 7
    %p79 = por %p77, %p78
    %p81 = scmp.ne.s32.totalorder %s64, %s80
    %p82 = scmp.eq.s32.totalorder %s16, 0
    %p83 = por %p81, %p82
    %s84 = ssub.s32 %s17, %s29
    %s85 = ssub.s32 %s18, %s25
    %s86 = sor.u32 %s84, %s85
    %p87 = scmp.eq.s32.totalorder %s86, 0
    %s89 = sadd.s32 %s88, 1
    %s90 = scalar_select %p87, %s88, %s89
    %p93 = pneg %p87
    %p94 = scmp.eq.s32.totalorder %s10, 7
    %p95 = por %p93, %p94
    %p96 = scmp.ne.s32.totalorder %s88, %s91
    %p97 = scmp.eq.s32.totalorder %s10, 0
    %p98 = por %p96, %p97
    %p99 = scmp.ne.s32.totalorder %s88, %s91
    %p100 = scmp.eq.s32.totalorder %s15, 7
    %p101 = por %p99, %p100
    %p102 = scmp.ne.s32.totalorder %s91, %s92
    %p103 = scmp.eq.s32.totalorder %s15, 0
    %p104 = por %p102, %p103
    %p105 = scmp.ne.s32.totalorder %s91, %s92
    %p106 = scmp.eq.s32.totalorder %s16, 7
    %p107 = por %p105, %p106
    %p109 = scmp.ne.s32.totalorder %s92, %s108
    %p110 = scmp.eq.s32.totalorder %s16, 0
    %p111 = por %p109, %p110
    %s112 = ssub.s32 %s17, %s29
    %p113 = scmp.eq.s32.totalorder %s112, 0
    %s115 = sadd.s32 %s114, 1
    %s116 = scalar_select %p113, %s114, %s115
    %p119 = pneg %p113
    %p120 = scmp.eq.s32.totalorder %s10, 7
    %p121 = por %p119, %p120
    %p122 = scmp.ne.s32.totalorder %s114, %s117
    %p123 = scmp.eq.s32.totalorder %s10, 0
    %p124 = por %p122, %p123
    %p125 = scmp.ne.s32.totalorder %s114, %s117
    %p126 = scmp.eq.s32.totalorder %s15, 7
    %p127 = por %p125, %p126
    %p128 = scmp.ne.s32.totalorder %s117, %s118
    %p129 = scmp.eq.s32.totalorder %s15, 0
    %p130 = por %p128, %p129
    %p131 = scmp.ne.s32.totalorder %s117, %s118
    %p132 = scmp.eq.s32.totalorder %s16, 7
    %p133 = por %p131, %p132
    %p135 = scmp.ne.s32.totalorder %s118, %s134
    %p136 = scmp.eq.s32.totalorder %s16, 0
    %p137 = por %p135, %p136
    %s138 = ssub.s32 %s17, %s29
    %p139 = scmp.eq.s32.totalorder %s138, 0
    %s141 = sadd.s32 %s140, 1
    %s142 = scalar_select %p139, %s140, %s141
    %p145 = pneg %p139
    %p146 = scmp.eq.s32.totalorder %s10, 7
    %p147 = por %p145, %p146
    %p148 = scmp.ne.s32.totalorder %s140, %s143
    %p149 = scmp.eq.s32.totalorder %s10, 0
    %p150 = por %p148, %p149
    %p151 = scmp.ne.s32.totalorder %s140, %s143
    %p152 = scmp.eq.s32.totalorder %s15, 7
    %p153 = por %p151, %p152
    %p154 = scmp.ne.s32.totalorder %s143, %s144
    %p155 = scmp.eq.s32.totalorder %s15, 0
    %p156 = por %p154, %p155
    %p157 = scmp.ne.s32.totalorder %s143, %s144
    %p158 = scmp.eq.s32.totalorder %s16, 7
    %p159 = por %p157, %p158
    %p161 = scmp.ne.s32.totalorder %s144, %s160
    %p162 = scmp.eq.s32.totalorder %s16, 0
    %p163 = por %p161, %p162
    %p164 = scmp.le.s32.totalorder 1, %s10
    %p165 = scmp.lt.s32.totalorder %s10, 9
    %p166 = pnand %p164, %p165
    %p167 = pneg %p166
    // Predicated region
    $region9: #{gfam_forward.1} parent=5 // pred_check
      _
    $region10: #{gfam_forward.1} parent=5 // pred_check_branch
      %169 = sbr.rel (%p166) target = $region12
    $region11: #{gfam_forward.1} parent=5 // pred_region
      %s170 = ssub.s32 %s10, 1
    $region12: #{gfam_forward.1} parent=5 // pred_fallthru
      _
    %p171 = scmp.lt.s32.totalorder %s10, 8
    // Predicated region
    $region13: #{gfam_forward.1} parent=5 // pred_check
      %p172 = pneg %p171
    $region14: #{gfam_forward.1} parent=5 // pred_check_branch
      %174 = sbr.rel (%p172) target = $region16
    $region15: #{gfam_forward.1} parent=5 // pred_region
      // Predicated region
      $region17: #{gfam_forward.1} parent=15 // pred_check
        %p175 = pneg %p42
      $region18: #{gfam_forward.1} parent=15 // pred_check_branch
        %177 = sbr.rel (%p175) target = $region20
      $region19: #{gfam_forward.1} parent=15 // pred_region
        %p178 = scmp.lt.s32.totalorder %s17, 1
        %s179 = scalar_select %p178, %s17, 1
        %s180 = smul.addr %s179, 4
        %s181 = smul.addr %s180, 8
        %s182 = scalar_lea.vmem %s0, %s181
      $region20: #{gfam_forward.1} parent=15 // pred_fallthru
        _
      // Predicated region
      $region21: #{gfam_forward.1} parent=15 // pred_check
        %p183 = pneg %p70
      $region22: #{gfam_forward.1} parent=15 // pred_check_branch
        %185 = sbr.rel (%p183) target = $region24
      $region23: #{gfam_forward.1} parent=15 // pred_region
        %p186 = scmp.lt.s32.totalorder %s17, 1
        %s187 = scalar_select %p186, %s17, 1
        %p188 = scmp.lt.s32.totalorder %s18, 3
        %s189 = scalar_select %p188, %s18, 3
        %s190 = smul.addr %s187, 4
        %s191 = sadd.s32 %s189, %s190
        %s192 = smul.addr %s191, 8
        %s193 = scalar_lea.vmem %s1, %s192
      $region24: #{gfam_forward.1} parent=15 // pred_fallthru
        _
      // Predicated region
      $region25: #{gfam_forward.1} parent=15 // pred_check
        %p194 = pneg %p98
      $region26: #{gfam_forward.1} parent=15 // pred_check_branch
        %196 = sbr.rel (%p194) target = $region28
      $region27: #{gfam_forward.1} parent=15 // pred_region
        %s197 = smul.u32 16, %s18
        %p198 = scmp.lt.s32.totalorder %s17, 1
        %s199 = scalar_select %p198, %s17, 1
        %p200 = scmp.lt.s32.totalorder %s197, 63
        %s201 = scalar_select %p200, %s197, 63
        %s202 = smul.addr %s199, 64
        %s203 = sadd.s32 %s201, %s202
        %s204 = smul.addr %s203, 4
        %s205 = scalar_lea.vmem %s2, %s204
        %s206 = smul.u32 16, %s18
      $region28: #{gfam_forward.1} parent=15 // pred_fallthru
        _
      // Predicated region
      $region29: #{gfam_forward.1} parent=15 // pred_check
        %p207 = pneg %p124
      $region30: #{gfam_forward.1} parent=15 // pred_check_branch
        %209 = sbr.rel (%p207) target = $region32
      $region31: #{gfam_forward.1} parent=15 // pred_region
        %p210 = scmp.lt.s32.totalorder %s17, 1
        %s211 = scalar_select %p210, %s17, 1
        %s212 = smul.addr %s211, 4
        %s213 = smul.addr %s212, 8
        %s214 = scalar_lea.vmem %s3, %s213
      $region32: #{gfam_forward.1} parent=15 // pred_fallthru
        _
    $region16: #{gfam_forward.1} parent=5 // pred_fallthru
      _
    %p215 = scmp.le.s32.totalorder 1, %s10
    %p216 = scmp.lt.s32.totalorder %s10, 9
    %p217 = pnand %p215, %p216
    %p218 = pneg %p217
    // Predicated region
    $region33: #{gfam_forward.1} parent=5 // pred_check
      _
    $region34: #{gfam_forward.1} parent=5 // pred_check_branch
      %220 = sbr.rel (%p217) target = $region36
    $region35: #{gfam_forward.1} parent=5 // pred_region
      %s221 = ssub.s32 %s10, 1
      %p222 = scmp.lt.s32.totalorder %s19, 1
      %s223 = scalar_select %p222, %s19, 1
      %s224 = smul.addr %s223, 4
      %s225 = smul.addr %s224, 8
      %s226 = scalar_lea.vmem %s0, %s225
      %p227 = pneg %p48
      %p228 = pneg %p45
      %p229 = scmp.lt.s32.totalorder %s19, 1
      %s230 = scalar_select %p229, %s19, 1
      %p231 = scmp.lt.s32.totalorder %s20, 3
      %s232 = scalar_select %p231, %s20, 3
      %s233 = smul.addr %s230, 4
      %s234 = sadd.s32 %s232, %s233
      %s235 = smul.addr %s234, 8
      %s236 = scalar_lea.vmem %s1, %s235
      %p237 = pneg %p76
      %p238 = pneg %p73
      %s239 = smul.u32 16, %s20
      %p240 = scmp.lt.s32.totalorder %s19, 1
      %s241 = scalar_select %p240, %s19, 1
      %p242 = scmp.lt.s32.totalorder %s239, 63
      %s243 = scalar_select %p242, %s239, 63
      %s244 = smul.addr %s241, 64
      %s245 = sadd.s32 %s243, %s244
      %s246 = smul.addr %s245, 4
      %s247 = scalar_lea.vmem %s2, %s246
      %p248 = pneg %p104
      %p249 = pneg %p101
      %p250 = scmp.lt.s32.totalorder %s19, 1
      %s251 = scalar_select %p250, %s19, 1
      %s252 = smul.addr %s251, 4
      %s253 = smul.addr %s252, 8
      %s254 = scalar_lea.vmem %s3, %s253
      %p255 = pneg %p130
      %p256 = pneg %p127
      %p257 = pneg %p156
      %p258 = pneg %p153
      %p259 = scmp.lt.s32.totalorder %s19, 1
      %s260 = scalar_select %p259, %s19, 1
      %s261 = smul.addr %s260, 4
      %s262 = smul.addr %s261, 8
      %s263 = scalar_lea.vmem %s4, %s262
      %p264 = scmp.lt.s32.totalorder %s19, 1
      %s265 = scalar_select %p264, %s19, 1
      %s266 = smul.addr %s265, 4
      %s267 = smul.addr %s266, 8
      %s268 = scalar_lea.vmem %s0, %s267
      %p269 = scmp.lt.s32.totalorder %s19, 1
      %s270 = scalar_select %p269, %s19, 1
      %p271 = scmp.lt.s32.totalorder %s20, 3
      %s272 = scalar_select %p271, %s20, 3
      %s273 = smul.addr %s270, 4
      %s274 = sadd.s32 %s272, %s273
      %s275 = smul.addr %s274, 8
      %s276 = scalar_lea.vmem %s1, %s275
      %s277 = smul.u32 16, %s20
      %p278 = scmp.lt.s32.totalorder %s19, 1
      %s279 = scalar_select %p278, %s19, 1
      %p280 = scmp.lt.s32.totalorder %s277, 63
      %s281 = scalar_select %p280, %s277, 63
      %s282 = smul.addr %s279, 64
      %s283 = sadd.s32 %s281, %s282
      %s284 = smul.addr %s283, 4
      %s285 = scalar_lea.vmem %s2, %s284
      %s286 = smul.u32 16, %s20
      %p287 = scmp.lt.s32.totalorder %s19, 1
      %s288 = scalar_select %p287, %s19, 1
      %s289 = smul.addr %s288, 4
      %s290 = smul.addr %s289, 8
      %s291 = scalar_lea.vmem %s3, %s290
      %p292 = scmp.lt.s32.totalorder %s19, 1
      %s293 = scalar_select %p292, %s19, 1
      %s294 = smul.addr %s293, 4
      %s295 = smul.addr %s294, 8
      %s296 = scalar_lea.vmem %s4, %s295
      %p298 = scmp.eq.s32.totalorder %s20, 0
      // Predicated region
      $region37: #{gfam_forward.1} parent=35 // pred_check
        %p299 = pneg %p298
      $region38: #{gfam_forward.1} parent=35 // pred_check_branch
        %301 = sbr.rel (%p299) target = $region40
      $region39: #{gfam_forward.1} parent=35 // pred_region
        %vm302 = vcmask 7168
        %303 = vst.msk [vmem:[#allocation2] sm:$0xff] %vm302, -inf
        %304 = vst.msk [vmem:[#allocation2 + $0x8] sm:$0xff] %vm302, -inf
        %305 = vst.msk [vmem:[#allocation2 + $0x10] sm:$0xff] %vm302, -inf
        %vm306 = vcmask 0
        %307 = vst.msk [vmem:[#allocation2 + $0x18] sm:$0x1] %vm306, -inf
        %308 = vst.msk [vmem:[#allocation3] sm:$0xff] %vm302, 0.0
        %309 = vst.msk [vmem:[#allocation3 + $0x8] sm:$0xff] %vm302, 0.0
        %310 = vst.msk [vmem:[#allocation3 + $0x10] sm:$0xff] %vm302, 0.0
        %311 = vst.msk [vmem:[#allocation3 + $0x18] sm:$0x1] %vm306, 0.0
        %312 = vst [vmem:[#allocation4] sm:$0xff] 0.0
        %313 = vst [vmem:[#allocation4 + $0x8] sm:$0xff] 0.0
        %314 = vst [vmem:[#allocation4 + $0x10] sm:$0xff] 0.0
        %315 = vst [vmem:[#allocation4 + $0x18] sm:$0x1] 0.0
      $region40: #{gfam_forward.1} parent=35 // pred_fallthru
        _
      %v316 = vld [vmem:[%s268] sm:$0xff]
      %v317 = vld [vmem:[%s268 + $0x8] sm:$0xff]
      %v318 = vld [vmem:[%s268 + $0x10] sm:$0xff]
      %v319 = vld [vmem:[%s268 + $0x18] sm:$0x1]
      %v320 = vld [vmem:[%s276] sm:$0xff]
      %vm321 = vcmask 64512
      %v323 = vsel %vm321, %v316, 0
      %v326 = vsel %vm321, %v317, 0
      %v329 = vsel %vm321, %v318, 0
      %v332 = vsel %vm321, %v319, 0
      %334 = vmatprep.subr.mxu0 0.0
      %335 = vmatpush1.msra.mxu0 %v320
      %336 = vmatprep.subr.mxu0 0.0
      %337 = vmatpush1.msra.mxu0 0.0
      %338 = vmatprep.subr.mxu0 0.0
      %339 = vmatpush1.msra.mxu0 0.0
      %340 = vmatprep.subr.mxu0 0.0
      %341 = vmatpush1.msra.mxu0 0.0
      %342 = vmatprep.subr.mxu0 0.0
      %343 = vmatpush1.msra.mxu0 0.0
      %344 = vmatprep.subr.mxu0 0.0
      %345 = vmatpush1.msra.mxu0 0.0
      %346 = vmatprep.subr.mxu0 0.0
      %347 = vmatpush1.msra.mxu0 0.0
      %348 = vmatprep.subr.mxu0 0.0
      %349 = vmatpush1.msra.mxu0 0.0
      %350 = vmatprep.subr.mxu0 0.0
      %351 = vmatpush1.msra.mxu0 0.0
      %352 = vmatprep.subr.mxu0 0.0
      %353 = vmatpush1.msra.mxu0 0.0
      %354 = vmatprep.subr.mxu0 0.0
      %355 = vmatpush1.msra.mxu0 0.0
      %356 = vmatprep.subr.mxu0 0.0
      %357 = vmatpush1.msra.mxu0 0.0
      %358 = vmatprep.subr.mxu0 0.0
      %359 = vmatpush1.msra.mxu0 0.0
      %360 = vmatprep.subr.mxu0 0.0
      %361 = vmatpush1.msra.mxu0 0.0
      %362 = vmatprep.subr.mxu0 0.0
      %363 = vmatpush1.msra.mxu0 0.0
      %364 = vmatprep.subr.mxu0 0.0
      %365 = vmatpush1.msra.mxu0 0.0
      %366 = vmatprep.subr.mxu0 0.0
      %367 = vmatpush1.msra.mxu0 0.0
      %368 = vmatprep.subr.mxu0 0.0
      %369 = vmatpush1.msra.mxu0 0.0
      %370 = vmatprep.subr.mxu0 0.0
      %371 = vmatpush1.msra.mxu0 0.0
      %372 = vmatprep.subr.mxu0 0.0
      %373 = vmatpush1.msra.mxu0 0.0
      %374 = vmatprep.subr.mxu0 0.0
      %375 = vmatpush1.msra.mxu0 0.0
      %376 = vmatprep.subr.mxu0 0.0
      %377 = vmatpush1.msra.mxu0 0.0
      %378 = vmatprep.subr.mxu0 0.0
      %379 = vmatpush1.msra.mxu0 0.0
      %380 = vmatprep.subr.mxu0 0.0
      %381 = vmatpush1.msra.mxu0 0.0
      %382 = vmatprep.subr.mxu0 0.0
      %383 = vmatpush1.msra.mxu0 0.0
      %384 = vmatprep.subr.mxu0 0.0
      %385 = vmatpush1.msra.mxu0 0.0
      %386 = vmatprep.subr.mxu0 0.0
      %387 = vmatpush1.msra.mxu0 0.0
      %388 = vmatprep.subr.mxu0 0.0
      %389 = vmatpush1.msra.mxu0 0.0
      %390 = vmatprep.subr.mxu0 0.0
      %391 = vmatpush1.msra.mxu0 0.0
      %392 = vmatprep.subr.mxu0 0.0
      %393 = vmatpush1.msra.mxu0 0.0
      %394 = vmatprep.subr.mxu0 0.0
      %395 = vmatpush1.msra.mxu0 0.0
      %396 = vmatprep.subr.mxu0 0.0
      %397 = vmatpush1.msra.mxu0 0.0
      %398 = vmatprep.mubr.f32.mxu0 0.0
      %399 = vmatmul.mubr.f32.gmra.mrb[0].mxu0 %v323
      %v400 = vpop.f32.mrb[0].mxu0
      %v401 = vadd.f32 0.0, %v400
      %v402 = vpop.f32.mrb[0].mxu0
      %403 = vmatprep.mubr.f32.mxu0 0.0
      %404 = vmatmul.mubr.f32.gmra.mrb[0].mxu0 %v326
      %v405 = vpop.f32.mrb[0].mxu0
      %v406 = vadd.f32 0.0, %v405
      %v407 = vpop.f32.mrb[0].mxu0
      %408 = vmatprep.mubr.f32.mxu0 0.0
      %409 = vmatmul.mubr.f32.gmra.mrb[0].mxu0 %v329
      %v410 = vpop.f32.mrb[0].mxu0
      %v411 = vadd.f32 0.0, %v410
      %v412 = vpop.f32.mrb[0].mxu0
      %413 = vmatprep.mubr.f32.mxu0 0.0
      %414 = vmatmul.mubr.f32.gmra.mrb[0].mxu0 %v332
      %v415 = vpop.f32.mrb[0].mxu0
      %v416 = vadd.f32 0.0, %v415
      %v417 = vpop.f32.mrb[0].mxu0
      %418 = vdwg.mxu0
      %v419 = vld [vmem:[%s291] sm:$0xff]
      %v420 = vld [vmem:[%s291 + $0x8] sm:$0xff]
      %v421 = vld [vmem:[%s291 + $0x10] sm:$0xff]
      %v422 = vld [vmem:[%s291 + $0x18] sm:$0x1]
      %424 = vset.pattern.permute.xlu0 0
      %425 = vperm.xlu0 %424, %v419
      %v426 = vpop.permute.xlu0 %425
      %429 = vset.pattern.permute.xlu0 0
      %430 = vperm.xlu0 %429, %v420
      %v431 = vpop.permute.xlu0 %430
      %434 = vset.pattern.permute.xlu0 0
      %435 = vperm.xlu0 %434, %v421
      %v436 = vpop.permute.xlu0 %435
      %439 = vset.pattern.permute.xlu0 0
      %440 = vperm.xlu0 %439, %v422
      %v441 = vpop.permute.xlu0 %440
      %v443 = vadd.f32 %v401, %v426
      %v444 = vadd.f32 %v406, %v431
      %v445 = vadd.f32 %v411, %v436
      %v446 = vadd.f32 %v416, %v441
      %v447 = vmax.f32 %v443, 0.0
      %v448 = vmax.f32 %v444, 0.0
      %v449 = vmax.f32 %v445, 0.0
      %v450 = vmax.f32 %v446, 0.0
      %vm451 = vcmp.ne.f32.partialorder %v447, 0.0
      %vm452 = vcmp.ne.f32.partialorder %v448, 0.0
      %vm453 = vcmp.ne.f32.partialorder %v449, 0.0
      %vm454 = vcmp.ne.f32.partialorder %v450, 0.0
      %v455 = vsel %vm451, 1, 0
      %v456 = vsel %vm452, 1, 0
      %v457 = vsel %vm453, 1, 0
      %v458 = vsel %vm454, 1, 0
      %v459 = vcvt.s32.f32 %v455
      %v460 = vcvt.s32.f32 %v456
      %v461 = vcvt.s32.f32 %v457
      %v462 = vcvt.s32.f32 %v458
      %v463 = vmul.f32 %v401, %v447
      %v464 = vmul.f32 %v406, %v448
      %v465 = vmul.f32 %v411, %v449
      %v466 = vmul.f32 %v416, %v450
      %v467 = vmul.f32 %v463, 10.0
      %v468 = vmul.f32 %v464, 10.0
      %v469 = vmul.f32 %v465, 10.0
      %v470 = vmul.f32 %v466, 10.0
      %s471 = smul.u32 %s20, 128
      %v472 = vlaneseq
      %v473 = vand.u32 %v472, 127
      %v474 = vstv %s471
      %v475 = vadd.s32 %v474, %v473
      %vm476 = vcmp.lt.s32.totalorder %v475, 400
      %v477 = vsel %vm476, 1, 0
      %vm478 = vcmp.eq.s32.totalorder %v477, 1
      %v479 = vsel %vm478, %v467, -1e+30
      %v480 = vsel %vm478, %v468, -1e+30
      %v481 = vsel %vm478, %v469, -1e+30
      %v482 = vsel %vm478, %v470, -1e+30
      %v483 = vld [vmem:[#allocation2] sm:$0xff]
      %v484 = vld [vmem:[#allocation2 + $0x8] sm:$0xff]
      %v485 = vld [vmem:[#allocation2 + $0x10] sm:$0xff]
      %v486 = vld [vmem:[#allocation2 + $0x18] sm:$0x1]
      %487 = vmax.xlane.f32.xlu0 %v479
      %v488 = vpop.xlane.xlu0 %487
      %489 = vmax.xlane.f32.xlu0 %v480
      %v490 = vpop.xlane.xlu0 %489
      %491 = vmax.xlane.f32.xlu0 %v481
      %v492 = vpop.xlane.xlu0 %491
      %vm493 = vcmask 1040384
      %v494 = vsel %vm493, %v482, -inf
      %495 = vmax.xlane.f32.xlu0 %v494
      %v496 = vpop.xlane.xlu0 %495
      %v497 = vmax.f32 %v483, %v488
      %v498 = vmax.f32 %v484, %v490
      %v499 = vmax.f32 %v485, %v492
      %v500 = vmax.f32 %v486, %v496
      %v501 = vsub.f32 %v483, %v497
      %v502 = vsub.f32 %v484, %v498
      %v503 = vsub.f32 %v485, %v499
      %v504 = vsub.f32 %v486, %v500
      %v505 = vmul.f32 %v501, 1.442695
      %v506 = vpow.pop %v505
      %v507 = vmul.f32 %v502, 1.442695
      %v508 = vpow.pop %v507
      %v509 = vmul.f32 %v503, 1.442695
      %v510 = vpow.pop %v509
      %v511 = vmul.f32 %v504, 1.442695
      %v512 = vpow.pop %v511
      %514 = vset.pattern.permute.xlu0 0
      %515 = vperm.xlu0 %514, %v497
      %v516 = vpop.permute.xlu0 %515
      %519 = vset.pattern.permute.xlu0 0
      %520 = vperm.xlu0 %519, %v498
      %v521 = vpop.permute.xlu0 %520
      %524 = vset.pattern.permute.xlu0 0
      %525 = vperm.xlu0 %524, %v499
      %v526 = vpop.permute.xlu0 %525
      %529 = vset.pattern.permute.xlu0 0
      %530 = vperm.xlu0 %529, %v500
      %v531 = vpop.permute.xlu0 %530
      %v533 = vsub.f32 %v479, %v516
      %v534 = vsub.f32 %v480, %v521
      %v535 = vsub.f32 %v481, %v526
      %v536 = vsub.f32 %v482, %v531
      %v537 = vmul.f32 %v533, 1.442695
      %v538 = vpow.pop %v537
      %v539 = vmul.f32 %v534, 1.442695
      %v540 = vpow.pop %v539
      %v541 = vmul.f32 %v535, 1.442695
      %v542 = vpow.pop %v541
      %v543 = vmul.f32 %v536, 1.442695
      %v544 = vpow.pop %v543
      %v545 = vld [vmem:[#allocation3] sm:$0xff]
      %v546 = vld [vmem:[#allocation3 + $0x8] sm:$0xff]
      %v547 = vld [vmem:[#allocation3 + $0x10] sm:$0xff]
      %v548 = vld [vmem:[#allocation3 + $0x18] sm:$0x1]
      %v549 = vmul.f32 %v506, %v545
      %v550 = vmul.f32 %v508, %v546
      %v551 = vmul.f32 %v510, %v547
      %v552 = vmul.f32 %v512, %v548
      %553 = vadd.xlane.f32.xlu0 %v538
      %v554 = vpop.xlane.xlu0 %553
      %555 = vadd.xlane.f32.xlu0 %v540
      %v556 = vpop.xlane.xlu0 %555
      %557 = vadd.xlane.f32.xlu0 %v542
      %v558 = vpop.xlane.xlu0 %557
      %v559 = vsel %vm493, %v544, 0.0
      %560 = vadd.xlane.f32.xlu0 %v559
      %v561 = vpop.xlane.xlu0 %560
      %v562 = vadd.f32 %v549, %v554
      %v563 = vadd.f32 %v550, %v556
      %v564 = vadd.f32 %v551, %v558
      %v565 = vadd.f32 %v552, %v561
      %vm566 = vcmask 7168
      %567 = vst.msk [vmem:[#allocation3] sm:$0xff] %vm566, %v562
      %568 = vst.msk [vmem:[#allocation3 + $0x8] sm:$0xff] %vm566, %v563
      %569 = vst.msk [vmem:[#allocation3 + $0x10] sm:$0xff] %vm566, %v564
      %vm570 = vcmask 0
      %571 = vst.msk [vmem:[#allocation3 + $0x18] sm:$0x1] %vm570, %v565
      %v572 = vmul.f32 %v538, %v459
      %v573 = vmul.f32 %v540, %v460
      %v574 = vmul.f32 %v542, %v461
      %v575 = vmul.f32 %v544, %v462
      %v576 = vpack.c.bf16 %v573, %v572
      %v577 = vpack.c.bf16 %v575, %v574
      %v578 = vld [vmem:[#allocation4] sm:$0xff]
      %v579 = vld [vmem:[#allocation4 + $0x8] sm:$0xff]
      %v580 = vld [vmem:[#allocation4 + $0x10] sm:$0xff]
      %v581 = vld [vmem:[#allocation4 + $0x18] sm:$0x1]
      %583 = vset.pattern.permute.xlu0 0
      %584 = vperm.xlu0 %583, %v506
      %v585 = vpop.permute.xlu0 %584
      %588 = vset.pattern.permute.xlu0 0
      %589 = vperm.xlu0 %588, %v508
      %v590 = vpop.permute.xlu0 %589
      %593 = vset.pattern.permute.xlu0 0
      %594 = vperm.xlu0 %593, %v510
      %v595 = vpop.permute.xlu0 %594
      %598 = vset.pattern.permute.xlu0 0
      %599 = vperm.xlu0 %598, %v512
      %v600 = vpop.permute.xlu0 %599
      %v602 = vmul.f32 %v585, %v578
      %v603 = vmul.f32 %v590, %v579
      %v604 = vmul.f32 %v595, %v580
      %v605 = vmul.f32 %v600, %v581
      %v606 = vld [vmem:[%s285] sm:$0xf]
      %v607 = vld [vmem:[%s285 + $0x4] sm:$0xf]
      %v608 = vld [vmem:[%s285 + $0x8] sm:$0xf]
      %v609 = vld [vmem:[%s285 + $0xc] sm:$0xf]
      %v610 = vld [vmem:[%s285 + $0x10] sm:$0xf]
      %v611 = vld [vmem:[%s285 + $0x14] sm:$0xf]
      %v612 = vld [vmem:[%s285 + $0x18] sm:$0xf]
      %v613 = vld [vmem:[%s285 + $0x1c] sm:$0xf]
      %v614 = vld [vmem:[%s285 + $0x20] sm:$0xf]
      %v615 = vld [vmem:[%s285 + $0x24] sm:$0xf]
      %v616 = vld [vmem:[%s285 + $0x28] sm:$0xf]
      %v617 = vld [vmem:[%s285 + $0x2c] sm:$0xf]
      %v618 = vld [vmem:[%s285 + $0x30] sm:$0xf]
      %v619 = vld [vmem:[%s285 + $0x34] sm:$0xf]
      %v620 = vld [vmem:[%s285 + $0x38] sm:$0xf]
      %v621 = vld [vmem:[%s285 + $0x3c] sm:$0xf]
      %v638 = vunpack.c.l.b16 %v606
      %v639 = vunpack.c.l.b16 %v607
      %v640 = vunpack.c.l.b16 %v608
      %v641 = vunpack.c.l.b16 %v609
      %v642 = vunpack.c.l.b16 %v610
      %v643 = vunpack.c.l.b16 %v611
      %v644 = vunpack.c.l.b16 %v612
      %v645 = vunpack.c.l.b16 %v613
      %v646 = vunpack.c.l.b16 %v614
      %v647 = vunpack.c.l.b16 %v615
      %v648 = vunpack.c.l.b16 %v616
      %v649 = vunpack.c.l.b16 %v617
      %v650 = vunpack.c.l.b16 %v618
      %v651 = vunpack.c.l.b16 %v619
      %v652 = vunpack.c.l.b16 %v620
      %v653 = vunpack.c.l.b16 %v621
      %v654 = vpack.c.b16 %v639, %v638
      %v655 = vpack.c.b16 %v641, %v640
      %v656 = vpack.c.b16 %v643, %v642
      %v657 = vpack.c.b16 %v645, %v644
      %v658 = vpack.c.b16 %v647, %v646
      %v659 = vpack.c.b16 %v649, %v648
      %v660 = vpack.c.b16 %v651, %v650
      %v661 = vpack.c.b16 %v653, %v652
      %670 = vmatprep.subr.bf16.mxu0 0
      %671 = vmatpush1.bf16.msra.mxu0 %v654
      %672 = vmatprep.subr.bf16.mxu0 0
      %673 = vmatpush1.bf16.msra.mxu0 %v655
      %674 = vmatprep.subr.bf16.mxu0 0
      %675 = vmatpush1.bf16.msra.mxu0 %v656
      %676 = vmatprep.subr.bf16.mxu0 0
      %677 = vmatpush1.bf16.msra.mxu0 %v657
      %678 = vmatprep.subr.bf16.mxu0 0
      %679 = vmatpush1.bf16.msra.mxu0 %v658
      %680 = vmatprep.subr.bf16.mxu0 0
      %681 = vmatpush1.bf16.msra.mxu0 %v659
      %682 = vmatprep.subr.bf16.mxu0 0
      %683 = vmatpush1.bf16.msra.mxu0 %v660
      %684 = vmatprep.subr.bf16.mxu0 0
      %685 = vmatpush1.bf16.msra.mxu0 %v661
      %686 = vmatprep.subr.bf16.mxu0 0
      %687 = vmatpush1.bf16.msra.mxu0 0
      %688 = vmatprep.subr.bf16.mxu0 0
      %689 = vmatpush1.bf16.msra.mxu0 0
      %690 = vmatprep.subr.bf16.mxu0 0
      %691 = vmatpush1.bf16.msra.mxu0 0
      %692 = vmatprep.subr.bf16.mxu0 0
      %693 = vmatpush1.bf16.msra.mxu0 0
      %694 = vmatprep.subr.bf16.mxu0 0
      %695 = vmatpush1.bf16.msra.mxu0 0
      %696 = vmatprep.subr.bf16.mxu0 0
      %697 = vmatpush1.bf16.msra.mxu0 0
      %698 = vmatprep.subr.bf16.mxu0 0
      %699 = vmatpush1.bf16.msra.mxu0 0
      %700 = vmatprep.subr.bf16.mxu0 0
      %701 = vmatpush1.bf16.msra.mxu0 0
      %702 = vmatprep.mubr.bf16.mxu0 0
      %703 = vmatmul.mubr.bf16.gmra.mrb[0].mxu0 %v576
      %v704 = vpop.f32.mrb[0].mxu0
      %v705 = vadd.f32 0.0, %v704
      %v706 = vpop.f32.mrb[0].mxu0
      %v707 = vpop.f32.mrb[0].mxu0
      %v708 = vadd.f32 0.0, %v707
      %v709 = vpop.f32.mrb[0].mxu0
      %710 = vmatprep.mubr.bf16.mxu0 0
      %711 = vmatmul.mubr.bf16.gmra.mrb[0].mxu0 %v577
      %v712 = vpop.f32.mrb[0].mxu0
      %v713 = vadd.f32 0.0, %v712
      %v714 = vpop.f32.mrb[0].mxu0
      %v715 = vpop.f32.mrb[0].mxu0
      %v716 = vadd.f32 0.0, %v715
      %v717 = vpop.f32.mrb[0].mxu0
      %718 = vdwg.mxu0
      %v719 = vadd.f32 %v602, %v705
      %v720 = vadd.f32 %v603, %v708
      %v721 = vadd.f32 %v604, %v713
      %v722 = vadd.f32 %v605, %v716
      %723 = vst [vmem:[#allocation4] sm:$0xff] %v719
      %724 = vst [vmem:[#allocation4 + $0x8] sm:$0xff] %v720
      %725 = vst [vmem:[#allocation4 + $0x10] sm:$0xff] %v721
      %726 = vst [vmem:[#allocation4 + $0x18] sm:$0x1] %v722
      %727 = vst.msk [vmem:[#allocation2] sm:$0xff] %vm566, %v497
      %728 = vst.msk [vmem:[#allocation2 + $0x8] sm:$0xff] %vm566, %v498
      %729 = vst.msk [vmem:[#allocation2 + $0x10] sm:$0xff] %vm566, %v499
      %730 = vst.msk [vmem:[#allocation2 + $0x18] sm:$0x1] %vm570, %v500
      %p731 = scmp.eq.s32.totalorder %s20, 3
      // Predicated region
      $region41: #{gfam_forward.1} parent=35 // pred_check
        %p732 = pneg %p731
      $region42: #{gfam_forward.1} parent=35 // pred_check_branch
        %734 = sbr.rel (%p732) target = $region44
      $region43: #{gfam_forward.1} parent=35 // pred_region
        %v735 = vld [vmem:[#allocation4] sm:$0xff]
        %v736 = vld [vmem:[#allocation4 + $0x8] sm:$0xff]
        %v737 = vld [vmem:[#allocation4 + $0x10] sm:$0xff]
        %v738 = vld [vmem:[#allocation4 + $0x18] sm:$0x1]
        %v739 = vld [vmem:[#allocation3] sm:$0xff]
        %v740 = vld [vmem:[#allocation3 + $0x8] sm:$0xff]
        %v741 = vld [vmem:[#allocation3 + $0x10] sm:$0xff]
        %v742 = vld [vmem:[#allocation3 + $0x18] sm:$0x1]
        %744 = vset.pattern.permute.xlu0 0
        %745 = vperm.xlu0 %744, %v739
        %v746 = vpop.permute.xlu0 %745
        %749 = vset.pattern.permute.xlu0 0
        %750 = vperm.xlu0 %749, %v740
        %v751 = vpop.permute.xlu0 %750
        %754 = vset.pattern.permute.xlu0 0
        %755 = vperm.xlu0 %754, %v741
        %v756 = vpop.permute.xlu0 %755
        %759 = vset.pattern.permute.xlu0 0
        %760 = vperm.xlu0 %759, %v742
        %v761 = vpop.permute.xlu0 %760
        %v763 = vrcp.pop %v746
        %v764 = vmul.f32 %v735, %v763
        %v765 = vrcp.pop %v751
        %v766 = vmul.f32 %v736, %v765
        %v767 = vrcp.pop %v756
        %v768 = vmul.f32 %v737, %v767
        %v769 = vrcp.pop %v761
        %v770 = vmul.f32 %v738, %v769
        %771 = vst [vmem:[%s296] sm:$0xff] %v764
        %772 = vst [vmem:[%s296 + $0x8] sm:$0xff] %v766
        %773 = vst [vmem:[%s296 + $0x10] sm:$0xff] %v768
        %774 = vst [vmem:[%s296 + $0x18] sm:$0x1] %v770
      $region44: #{gfam_forward.1} parent=35 // pred_fallthru
        _
      %p775 = scmp.lt.s32.totalorder %s19, 1
      %s776 = scalar_select %p775, %s19, 1
      %s777 = smul.addr %s776, 4
      %s778 = smul.addr %s777, 8
      %s779 = scalar_lea.vmem %s4, %s778
      // Predicated region
      $region45: #{gfam_forward.1} parent=35 // pred_check
        %p780 = pneg %p153
      $region46: #{gfam_forward.1} parent=35 // pred_check_branch
        %782 = sbr.rel (%p780) target = $region48
      $region47: #{gfam_forward.1} parent=35 // pred_region
        _
      $region48: #{gfam_forward.1} parent=35 // pred_fallthru
        _
    $region36: #{gfam_forward.1} parent=5 // pred_fallthru
      _
    %p783 = scmp.le.s32.totalorder 2, %s10
    // Predicated region
    $region49: #{gfam_forward.1} parent=5 // pred_check
      %p784 = pneg %p783
    $region50: #{gfam_forward.1} parent=5 // pred_check_branch
      %786 = sbr.rel (%p784) target = $region52
    $region51: #{gfam_forward.1} parent=5 // pred_region
      %s787 = ssub.s32 %s10, 2
      // Predicated region
      $region53: #{gfam_forward.1} parent=51 // pred_check
        %p788 = pneg %p159
      $region54: #{gfam_forward.1} parent=51 // pred_check_branch
        %790 = sbr.rel (%p788) target = $region56
      $region55: #{gfam_forward.1} parent=51 // pred_region
        %p791 = scmp.lt.s32.totalorder %s21, 1
        %s792 = scalar_select %p791, %s21, 1
        %s793 = smul.addr %s792, 4
        %s794 = smul.addr %s793, 8
        %s795 = scalar_lea.vmem %s4, %s794
      $region56: #{gfam_forward.1} parent=51 // pred_fallthru
        _
    $region52: #{gfam_forward.1} parent=5 // pred_fallthru
      _
  $region6: #{gfam_forward.1} parent=0 // loop_footer
    %s14 = sadd.s32 1, %s10
  $region7: #{gfam_forward.1} parent=0 // loop_footer_branch
    %9 = sbr.rel target = $region3
  $region8: #{gfam_forward.1} parent=0 // loop_exit
    _

</llo_original>
